<compile_context>
chip_gen: v5e
topology: v5e:2x2
jax: 0.10.0
libtpu: 0.0.40
codegen_flags: <defaults>
</compile_context>

<pallas_src>
import functools

import jax
import jax.numpy as jnp
from jax.experimental import pallas as pl
from jax.experimental.pallas import tpu as pltpu


def _round_up(x, m):
    return (x + m - 1) // m * m


# ---------------------------------------------------------------------------
# Chip-generation aware tile / VMEM configuration.
# ---------------------------------------------------------------------------
@functools.lru_cache(maxsize=None)
def _chip_config():
    """Pick (tm, tf, vmem_limit_bytes, two_tc) from the chip's VMEM capacity.

    128 MiB VMEM chips (v5e / v6e, single TensorCore): large row tile so the
    kernel is MXU-bound (arithmetic intensity ~ tm FLOP/byte; v6e bf16 ridge
    ~650-700, v5e ~240).  64 MiB chips (v7x, 2 TensorCores): tm=512 is past
    the ~310 FLOP/byte ridge while keeping live buffers <= ~48 MiB.
    """
    vmem_bytes = None
    try:
        info = pltpu.get_tpu_info()
        vmem_bytes = getattr(info, "vmem_capacity_bytes", None)
    except Exception:  # non-TPU backend / API unavailable -> conservative tier
        vmem_bytes = None
    if vmem_bytes is not None and vmem_bytes >= 100 * 1024 * 1024:
        # v5e / v6e.  (tf could be bumped to 1024 for bf16 outputs; with f32
        # outputs tm=1024/tf=512 keeps total live buffers ~80 MiB.)
        return dict(tm=1024, tf=512,
                    vmem_limit_bytes=100 * 1024 * 1024, two_tc=False)
    # v7x (64 MiB physical VMEM per TC) or unknown backend.
    return dict(tm=512, tf=512,
                vmem_limit_bytes=56 * 1024 * 1024, two_tc=True)


# ---------------------------------------------------------------------------
# Kernel body.  Grid = (rows / tm, d_ff / tf); d_ff is the reduction axis.
# ---------------------------------------------------------------------------
def _ffn_kernel(x_ref, w1_ref, b1_ref, w2_ref, b2_ref, o_ref, acc_ref):
    # x_ref : (tm, d_model)      bf16 (or f32) row tile (i-resident)
    # w1_ref: (d_model, tf)      d_ff tile of W1
    # b1_ref: (1, tf)            f32
    # w2_ref: (tf, d_model)      d_ff tile of W2
    # b2_ref: (1, d_model)       f32 (grid-invariant)
    # o_ref : (tm, d_model)      written only on the last reduction step
    # acc_ref: (tm, d_model) f32 accumulator, resident across the d_ff loop
    j = pl.program_id(1)

    # Matmul 1 (MXU, f32 accumulation) + bias + ReLU on this d_ff tile.
    h = jnp.dot(x_ref[...], w1_ref[...], preferred_element_type=jnp.float32)
    h = jnp.maximum(h + b1_ref[...], 0.0)
    # dropout == identity (eval mode)

    # Matmul 2: this d_ff tile's partial contribution to the output rows.
    partial = jnp.dot(h.astype(w2_ref.dtype), w2_ref[...],
                      preferred_element_type=jnp.float32)

    @pl.when(j == 0)
    def _first():
        # Assign instead of zero-then-add: saves one full (tm, d_model) f32
        # VMEM store per row tile (vst is the narrowest bundle slot).
        acc_ref[...] = partial

    @pl.when(j > 0)
    def _rest():
        acc_ref[...] += partial

    @pl.when(j == pl.num_programs(1) - 1)
    def _finalize():
        # b2 is added exactly once, in the finalize branch.
        o_ref[...] = (acc_ref[...] + b2_ref[...]).astype(o_ref.dtype)


# ---------------------------------------------------------------------------
# Parameter preparation (pad + cast) — hoist this OFF the per-call hot path.
# ---------------------------------------------------------------------------
def prepare_ffn_params(w1, b1, w2, b2, *, tf=None, compute_dtype=jnp.bfloat16):
    """Pad + cast FFN weights once; reuse the result across calls.

    w1: (d_model, d_ff), w2: (d_ff, d_model) — already transposed vs. torch
    nn.Linear, so the math is x @ W (== x @ weight.T in torch).
    """
    d_model, d_ff = w1.shape
    assert w2.shape == (d_ff, d_model)
    assert b1.shape == (d_ff,) and b2.shape == (d_model,)

    cfg = _chip_config()
    if tf is None:
        tf = cfg["tf"]
    tf_eff = _round_up(min(tf, _round_up(d_ff, 128)), 128)
    dm_pad = _round_up(d_model, 128)          # lane-dense output last dim
    dff_pad = _round_up(d_ff, tf_eff)

    # Zero padding keeps the math exact: padded d_ff columns give
    # relu(0 + 0) = 0, padded d_model columns contribute 0.
    w1p = jnp.pad(w1, ((0, dm_pad - d_model), (0, dff_pad - d_ff))).astype(compute_dtype)
    w2p = jnp.pad(w2, ((0, dff_pad - d_ff), (0, dm_pad - d_model))).astype(compute_dtype)
    b1p = jnp.pad(b1, (0, dff_pad - d_ff)).reshape(1, dff_pad).astype(jnp.float32)
    b2p = jnp.pad(b2, (0, dm_pad - d_model)).reshape(1, dm_pad).astype(jnp.float32)

    return dict(w1=w1p, b1=b1p, w2=w2p, b2=b2p,
                d_model=d_model, d_ff=d_ff, dm_pad=dm_pad, dff_pad=dff_pad,
                tf=tf_eff, compute_dtype=compute_dtype)


# ---------------------------------------------------------------------------
# Hot-path call: only x is (optionally) padded / cast here.
# ---------------------------------------------------------------------------
def feed_forward_prepared(x, params, *, tm=None, vmem_limit_bytes=None):
    """x: (batch, seq, d_model) -> (batch, seq, d_model)."""
    cfg = _chip_config()
    if tm is None:
        tm = cfg["tm"]
    if vmem_limit_bytes is None:
        vmem_limit_bytes = cfg["vmem_limit_bytes"]

    batch, seq, d_model = x.shape
    assert d_model == params["d_model"]
    M = batch * seq
    compute_dtype = params["compute_dtype"]
    dm_pad = params["dm_pad"]
    dff_pad = params["dff_pad"]
    tf_eff = params["tf"]

    # bf16 packs 16 rows per vreg sublane-wise; align the row tile accordingly.
    row_align = 16 if jnp.dtype(compute_dtype).itemsize == 2 else 8
    tm_eff = _round_up(min(tm, _round_up(M, row_align)), row_align)
    m_pad = _round_up(M, tm_eff)

    # Megacore guard: on 2-TC chips (v7x) the "parallel" row axis is sharded
    # across cores — make sure there are >= 2 row blocks whenever there is
    # anything to split, so one core does not idle for small M.
    if cfg["two_tc"] and (m_pad // tm_eff) < 2 and M > row_align:
        tm_eff = _round_up(max(row_align, pl.cdiv(M, 2)), row_align)
        m_pad = _round_up(M, tm_eff)

    out_dtype = x.dtype
    x2d = x.reshape(M, d_model)
    if (m_pad, dm_pad) != (M, d_model):
        x2d = jnp.pad(x2d, ((0, m_pad - M), (0, dm_pad - d_model)))
    x2d = x2d.astype(compute_dtype)

    grid = (m_pad // tm_eff, dff_pad // tf_eff)   # reduction (d_ff) axis last

    out2d = pl.pallas_call(
        _ffn_kernel,
        out_shape=jax.ShapeDtypeStruct((m_pad, dm_pad), out_dtype),
        grid_spec=pltpu.PrefetchScalarGridSpec(
            num_scalar_prefetch=0,
            grid=grid,
            in_specs=[
                pl.BlockSpec((tm_eff, dm_pad), lambda i, j: (i, 0)),   # x rows
                pl.BlockSpec((dm_pad, tf_eff), lambda i, j: (0, j)),   # W1 tile
                pl.BlockSpec((1, tf_eff),      lambda i, j: (0, j)),   # b1 tile
                pl.BlockSpec((tf_eff, dm_pad), lambda i, j: (j, 0)),   # W2 tile
                pl.BlockSpec((1, dm_pad),      lambda i, j: (0, 0)),   # b2
            ],
            out_specs=pl.BlockSpec((tm_eff, dm_pad), lambda i, j: (i, 0)),
            scratch_shapes=[pltpu.VMEM((tm_eff, dm_pad), jnp.float32)],
        ),
        compiler_params=pltpu.CompilerParams(
            dimension_semantics=("parallel", "arbitrary"),
            vmem_limit_bytes=vmem_limit_bytes,
        ),
    )(x2d, params["w1"], params["b1"], params["w2"], params["b2"])

    return out2d[:M, :d_model].reshape(batch, seq, d_model)


def feed_forward(x, w1, b1, w2, b2, *, tm=None, tf=None,
                 compute_dtype=jnp.bfloat16, vmem_limit_bytes=None):
    """One-shot convenience path (pads/casts weights per call).

    For repeated calls, use prepare_ffn_params() once + feed_forward_prepared()
    so the weight pad/cast stays off the critical path.
    """
    params = prepare_ffn_params(w1, b1, w2, b2, tf=tf,
                                compute_dtype=compute_dtype)
    return feed_forward_prepared(x, params, tm=tm,
                                 vmem_limit_bytes=vmem_limit_bytes)


def feed_forward_ref(x, w1, b1, w2, b2):
    h = jnp.maximum(jnp.einsum("bsd,df->bsf", x, w1) + b1, 0.0)
    return jnp.einsum("bsf,fd->bsd", h, w2) + b2


if __name__ == "__main__":
    # Small shapes consistent with the module: (batch, seq, d_model), d_ff.
    batch, seq, d_model, d_ff = 2, 8, 32, 64

    key = jax.random.PRNGKey(0)
    kx, k1, kb1, k2, kb2 = jax.random.split(key, 5)

    x = jax.random.normal(kx, (batch, seq, d_model), dtype=jnp.float32)
    # Deterministic parameter init (uniform, like torch Linear default scale).
    lim1 = 1.0 / (d_model ** 0.5)
    lim2 = 1.0 / (d_ff ** 0.5)
    w1 = jax.random.uniform(k1, (d_model, d_ff), jnp.float32, -lim1, lim1)
    b1 = jax.random.uniform(kb1, (d_ff,), jnp.float32, -lim1, lim1)
    w2 = jax.random.uniform(k2, (d_ff, d_model), jnp.float32, -lim2, lim2)
    b2 = jax.random.uniform(kb2, (d_model,), jnp.float32, -lim2, lim2)

    ref = feed_forward_ref(x, w1, b1, w2, b2)

    # f32 compute path: tight check against the pure-JAX reference.
    params_f32 = prepare_ffn_params(w1, b1, w2, b2, compute_dtype=jnp.float32)
    out_f32 = jax.block_until_ready(feed_forward_prepared(x, params_f32))
    assert out_f32.shape == (batch, seq, d_model)
    assert jnp.allclose(out_f32, ref, atol=1e-5, rtol=1e-5)

    # Default bf16 MXU path (f32 accumulation): loose tolerance vs f32 ref.
    params_bf16 = prepare_ffn_params(w1, b1, w2, b2)   # hoisted pad/cast
    out_bf16 = jax.block_until_ready(feed_forward_prepared(x, params_bf16))
    assert out_bf16.shape == (batch, seq, d_model)
    assert jnp.allclose(out_bf16, ref, atol=5e-2, rtol=5e-2)

    # Convenience one-shot wrapper still works.
    out_conv = jax.block_until_ready(feed_forward(x, w1, b1, w2, b2))
    assert jnp.allclose(out_conv, ref, atol=5e-2, rtol=5e-2)

    print("KERNEL_OK")
</pallas_src>

<mosaic_0001>
module attributes {stable_mosaic.version = 11 : i64} {
  func.func @_ffn_kernel(%arg0: i32, %arg1: i32, %arg2: memref<8x128xf32, #tpu.memory_space<vmem>>, %arg3: memref<128x128xf32, #tpu.memory_space<vmem>>, %arg4: memref<1x128xf32, #tpu.memory_space<vmem>>, %arg5: memref<128x128xf32, #tpu.memory_space<vmem>>, %arg6: memref<1x128xf32, #tpu.memory_space<vmem>>, %arg7: memref<8x128xf32, #tpu.memory_space<vmem>>, %arg8: memref<8x128xf32, #tpu.memory_space<vmem>>) attributes {dimension_semantics = [#tpu.dimension_semantics<parallel>, #tpu.dimension_semantics<arbitrary>], iteration_bounds = array<i64: 2, 1>, scalar_prefetch = 0 : i64, scratch_operands = 1 : i64, tpu.core_type = #tpu.core_type<tc>, window_params = [{transform_indices = @transform_0, window_bounds = array<i64: 8, 128>}, {transform_indices = @transform_1, window_bounds = array<i64: 128, 128>}, {transform_indices = @transform_2, window_bounds = array<i64: 1, 128>}, {transform_indices = @transform_3, window_bounds = array<i64: 128, 128>}, {pipeline_mode = #tpu.pipeline_mode<synchronous>, transform_indices = @transform_4, window_bounds = array<i64: 1, 128>}, {transform_indices = @transform_5, window_bounds = array<i64: 8, 128>}]} {
    %c0 = arith.constant 0 : index
    %c0_0 = arith.constant 0 : index
    %0 = vector.load %arg2[%c0, %c0_0] : memref<8x128xf32, #tpu.memory_space<vmem>>, vector<8x128xf32>
    %c0_1 = arith.constant 0 : index
    %c0_2 = arith.constant 0 : index
    %1 = vector.load %arg3[%c0_1, %c0_2] : memref<128x128xf32, #tpu.memory_space<vmem>>, vector<128x128xf32>
    %cst = arith.constant dense<0.000000e+00> : vector<8x128xf32>
    %2 = tpu.matmul %0, %1, %cst {dimension_numbers = #tpu.dot_dimension_numbers<[1], [0], [0], [1], [0, 0, 1, 1], [], []>} : vector<8x128xf32>, vector<128x128xf32>, vector<8x128xf32> -> vector<8x128xf32>
    %c0_3 = arith.constant 0 : index
    %c0_4 = arith.constant 0 : index
    %3 = vector.load %arg4[%c0_3, %c0_4] : memref<1x128xf32, #tpu.memory_space<vmem>>, vector<1x128xf32>
    %4 = vector.broadcast %3 : vector<1x128xf32> to vector<8x128xf32>
    %5 = arith.addf %2, %4 : vector<8x128xf32>
    %cst_5 = arith.constant 0.000000e+00 : f32
    %6 = vector.broadcast %cst_5 : f32 to vector<8x128xf32>
    %7 = arith.maximumf %5, %6 : vector<8x128xf32>
    %c0_6 = arith.constant 0 : index
    %c0_7 = arith.constant 0 : index
    %8 = vector.load %arg5[%c0_6, %c0_7] : memref<128x128xf32, #tpu.memory_space<vmem>>, vector<128x128xf32>
    %cst_8 = arith.constant dense<0.000000e+00> : vector<8x128xf32>
    %9 = tpu.matmul %7, %8, %cst_8 {dimension_numbers = #tpu.dot_dimension_numbers<[1], [0], [0], [1], [0, 0, 1, 1], [], []>} : vector<8x128xf32>, vector<128x128xf32>, vector<8x128xf32> -> vector<8x128xf32>
    %c0_i32 = arith.constant 0 : i32
    %10 = arith.cmpi eq, %arg1, %c0_i32 : i32
    %11 = arith.extui %10 : i1 to i32
    %c0_i32_9 = arith.constant 0 : i32
    %12 = arith.cmpi ne, %11, %c0_i32_9 : i32
    scf.if %12 {
      %c0_14 = arith.constant 0 : index
      %c0_15 = arith.constant 0 : index
      %19 = vector.load %arg8[%c0_14, %c0_15] : memref<8x128xf32, #tpu.memory_space<vmem>>, vector<8x128xf32>
      tpu.vector_store %arg8[%c0_14, %c0_15], %9 {strides = array<i32>} : memref<8x128xf32, #tpu.memory_space<vmem>>, vector<8x128xf32>,
    } else {
    }
    %c0_i32_10 = arith.constant 0 : i32
    %13 = arith.cmpi sgt, %arg1, %c0_i32_10 : i32
    %14 = arith.extui %13 : i1 to i32
    %c0_i32_11 = arith.constant 0 : i32
    %15 = arith.cmpi ne, %14, %c0_i32_11 : i32
    scf.if %15 {
      %c0_14 = arith.constant 0 : index
      %c0_15 = arith.constant 0 : index
      %19 = vector.load %arg8[%c0_14, %c0_15] : memref<8x128xf32, #tpu.memory_space<vmem>>, vector<8x128xf32>
      %20 = arith.addf %19, %9 : vector<8x128xf32>
      %c0_16 = arith.constant 0 : index
      %c0_17 = arith.constant 0 : index
      %21 = vector.load %arg8[%c0_16, %c0_17] : memref<8x128xf32, #tpu.memory_space<vmem>>, vector<8x128xf32>
      tpu.vector_store %arg8[%c0_16, %c0_17], %20 {strides = array<i32>} : memref<8x128xf32, #tpu.memory_space<vmem>>, vector<8x128xf32>,
    } else {
    }
    %c0_i32_12 = arith.constant 0 : i32
    %16 = arith.cmpi eq, %arg1, %c0_i32_12 : i32
    %17 = arith.extui %16 : i1 to i32
    %c0_i32_13 = arith.constant 0 : i32
    %18 = arith.cmpi ne, %17, %c0_i32_13 : i32
    scf.if %18 {
      %c0_14 = arith.constant 0 : index
      %c0_15 = arith.constant 0 : index
      %19 = vector.load %arg8[%c0_14, %c0_15] : memref<8x128xf32, #tpu.memory_space<vmem>>, vector<8x128xf32>
      %c0_16 = arith.constant 0 : index
      %c0_17 = arith.constant 0 : index
      %20 = vector.load %arg6[%c0_16, %c0_17] : memref<1x128xf32, #tpu.memory_space<vmem>>, vector<1x128xf32>
      %21 = vector.broadcast %20 : vector<1x128xf32> to vector<8x128xf32>
      %22 = arith.addf %19, %21 : vector<8x128xf32>
      %c0_18 = arith.constant 0 : index
      %c0_19 = arith.constant 0 : index
      %23 = vector.load %arg7[%c0_18, %c0_19] : memref<8x128xf32, #tpu.memory_space<vmem>>, vector<8x128xf32>
      tpu.vector_store %arg7[%c0_18, %c0_19], %22 {strides = array<i32>} : memref<8x128xf32, #tpu.memory_space<vmem>>, vector<8x128xf32>,
    } else {
    }
    return
  }
  func.func @transform_0(%arg0: i32, %arg1: i32) -> (i32, i32) {
    %c0_i32 = arith.constant 0 : i32
    %c0_i32_0 = arith.constant 0 : i32
    return %arg0, %c0_i32 : i32, i32
  }
  func.func @transform_1(%arg0: i32, %arg1: i32) -> (i32, i32) {
    %c0_i32 = arith.constant 0 : i32
    %c0_i32_0 = arith.constant 0 : i32
    return %c0_i32, %arg1 : i32, i32
  }
  func.func @transform_2(%arg0: i32, %arg1: i32) -> (i32, i32) {
    %c0_i32 = arith.constant 0 : i32
    %c0_i32_0 = arith.constant 0 : i32
    return %c0_i32, %arg1 : i32, i32
  }
  func.func @transform_3(%arg0: i32, %arg1: i32) -> (i32, i32) {
    %c0_i32 = arith.constant 0 : i32
    %c0_i32_0 = arith.constant 0 : i32
    return %arg1, %c0_i32 : i32, i32
  }
  func.func @transform_4(%arg0: i32, %arg1: i32) -> (i32, i32) {
    %c0_i32 = arith.constant 0 : i32
    %c0_i32_0 = arith.constant 0 : i32
    %c0_i32_1 = arith.constant 0 : i32
    return %c0_i32, %c0_i32_0 : i32, i32
  }
  func.func @transform_5(%arg0: i32, %arg1: i32) -> (i32, i32) {
    %c0_i32 = arith.constant 0 : i32
    %c0_i32_0 = arith.constant 0 : i32
    return %arg0, %c0_i32 : i32, i32
  }
}

</mosaic_0001>

<llo_original>
// kernel: tpu_custom_call.1
$region0: #{tpu_custom_call.1}
  #allocation0 [shape = 'u32[]', space=smem, size = 0x4, offset = 0x4, fixed_abs, tag = 'smem constant byte address 0x4 - core index']
  #allocation1 [shape = 'u32[72,128]{1,0:T(1,128)}', space=vmem, size = 0x9000, scoped, tag = 'internal scratch']
  #allocation2 [shape = 'f32[8,128]{1,0:T(8,128)}', space=vmem, size = 0x1000, scoped, tag = 'scratch operand']
  %s0 = inlined_call_operand.hbm [shape: f32[16,128], index: 0, kind: input, shape index: {}]
  %s1 = inlined_call_operand.hbm [shape: f32[128,128], index: 1, kind: input, shape index: {}]
  %s2 = inlined_call_operand.vmem [shape: f32[1,128], index: 2, kind: input, shape index: {}]
  %s3 = inlined_call_operand.hbm [shape: f32[128,128], index: 3, kind: input, shape index: {}]
  %s4 = inlined_call_operand.vmem [shape: f32[1,128], index: 4, kind: input, shape index: {}]
  %s5 = inlined_call_operand.hbm [shape: f32[16,128], index: 5, kind: output, shape index: {}]
  %s6 = sld [smem:[#allocation0]]
  $region77: #{tpu_custom_call.1} parent=0
    _
  %s8 = ssub.s32 1, %s6
  %s9 = scalar_select 0, %s8, %s6
  $region1: #{tpu_custom_call.1} parent=0
    #allocation3 [shape = 'u8[8192]{0}', space=vmem, size = 0x2000, scoped, tag = 'input window, operand 0']
    #allocation4 [shape = 's32[2]{0}', space=sflag, size = 0x8, scoped, tag = 'scoped memory for tpu_custom_call.1']
    #allocation5 [shape = 's32[2]{0}', space=sflag, size = 0x8, scoped, tag = 'scoped memory for tpu_custom_call.1']
    #allocation6 [shape = 'u8[65536]{0}', space=vmem, size = 0x10000, scoped, tag = 'input window, operand 1, single buffered']
    #allocation7 [shape = 's32[1]{0}', space=sflag, size = 0x4, scoped, tag = 'scoped memory for tpu_custom_call.1']
    #allocation8 [shape = 'u8[65536]{0}', space=vmem, size = 0x10000, scoped, tag = 'input window, operand 3, single buffered']
    #allocation9 [shape = 'u8[8192]{0}', space=vmem, size = 0x2000, scoped, tag = 'output window, operand 0']
    %10 = vsyncpa [#allocation4], 0
    %s11 = scalar_lea.sflag [#allocation4], 1
    %12 = vsyncpa %s11, 0
    %13 = vsyncpa [#allocation7], 0
    %14 = vsyncpa [#allocation5], 0
    %s15 = scalar_lea.sflag [#allocation5], 1
    %16 = vsyncpa %s15, 0
    loop: start=0, step=1, limit=4
    $region2: #{tpu_custom_call.1} parent=1 // loop_pre_header
      _
    $region3: #{tpu_custom_call.1} parent=1 // loop_header
      %s18 = sphi 0, %s22
      %p19 = scmp.ge.s32.totalorder %s18, 4
      %s25 = sphi 0, %s37
      %s26 = sphi 0, %s33
      %s27 = sphi 0, %s25
      %s28 = sphi 0, %s26
      %s29 = sphi 0, %s27
      %s30 = sphi 0, %s28
      %s40 = sphi 0, %s42
      %s43 = sphi 0, %s40
      %s44 = sphi 0, %s43
      %s60 = sphi 0, %s44
      %s66 = sphi 0, %s68
      %s69 = sphi 0, %s66
      %s70 = sphi 0, %s69
      %s86 = sphi 0, %s70
      %s92 = sphi 0, %s94
      %s95 = sphi 0, %s92
      %s96 = sphi 0, %s95
      %s112 = sphi 0, %s96
      %s118 = sphi 0, %s120
      %s121 = sphi 0, %s118
      %s122 = sphi 0, %s121
      %s138 = sphi 0, %s122
      %s142 = sphi 0, %s142
      %s144 = sphi 0, %s142
      %s145 = sphi 0, %s144
      %s159 = sphi 0, %s145
      %s165 = sphi 0, %s167
      %s168 = sphi 0, %s165
      %s169 = sphi 0, %s168
      %s185 = sphi 0, %s169
    $region4: #{tpu_custom_call.1} parent=1 // loop_header_branch
      %21 = sbr.rel (%p19) target = $region8
    $region5: #{tpu_custom_call.1} parent=1 // loop_body
      %s23 = ssub.s32 %s18, 1
      %s24 = ssub.s32 %s18, 2
      %s31 = sadd.s32 1, %s26
      %p32 = scmp.ge.s32.totalorder %s31, 1
      %s33 = scalar_select %p32, 0, %s31
      %s34 = sadd.s32 1, %s25
      %s35 = scalar_select %p32, %s34, %s25
      %p36 = scmp.ge.s32.totalorder %s35, 2
      %s37 = scalar_select %p36, 0, %s35
      %s38 = ssub.s32 %s25, %s37
      %p39 = scmp.eq.s32.totalorder %s38, 0
      %s41 = sadd.s32 %s40, 1
      %s42 = scalar_select %p39, %s40, %s41
      %p45 = pneg %p39
      %p46 = scmp.eq.s32.totalorder %s18, 1
      %p47 = por %p45, %p46
      %p48 = scmp.ne.s32.totalorder %s40, %s43
      %p49 = scmp.eq.s32.totalorder %s18, 0
      %p50 = por %p48, %p49
      %p51 = scmp.ne.s32.totalorder %s40, %s43
      %p52 = scmp.eq.s32.totalorder %s23, 1
      %p53 = por %p51, %p52
      %p54 = scmp.ne.s32.totalorder %s43, %s44
      %p55 = scmp.eq.s32.totalorder %s23, 0
      %p56 = por %p54, %p55
      %p57 = scmp.ne.s32.totalorder %s43, %s44
      %p58 = scmp.eq.s32.totalorder %s24, 1
      %p59 = por %p57, %p58
      %p61 = scmp.ne.s32.totalorder %s44, %s60
      %p62 = scmp.eq.s32.totalorder %s24, 0
      %p63 = por %p61, %p62
      %s64 = ssub.s32 %s26, %s33
      %p65 = scmp.eq.s32.totalorder %s64, 0
      %s67 = sadd.s32 %s66, 1
      %s68 = scalar_select %p65, %s66, %s67
      %p71 = pneg %p65
      %p72 = scmp.eq.s32.totalorder %s18, 1
      %p73 = por %p71, %p72
      %p74 = scmp.ne.s32.totalorder %s66, %s69
      %p75 = scmp.eq.s32.totalorder %s18, 0
      %p76 = por %p74, %p75
      %p77 = scmp.ne.s32.totalorder %s66, %s69
      %p78 = scmp.eq.s32.totalorder %s23, 1
      %p79 = por %p77, %p78
      %p80 = scmp.ne.s32.totalorder %s69, %s70
      %p81 = scmp.eq.s32.totalorder %s23, 0
      %p82 = por %p80, %p81
      %p83 = scmp.ne.s32.totalorder %s69, %s70
      %p84 = scmp.eq.s32.totalorder %s24, 1
      %p85 = por %p83, %p84
      %p87 = scmp.ne.s32.totalorder %s70, %s86
      %p88 = scmp.eq.s32.totalorder %s24, 0
      %p89 = por %p87, %p88
      %s90 = ssub.s32 %s26, %s33
      %p91 = scmp.eq.s32.totalorder %s90, 0
      %s93 = sadd.s32 %s92, 1
      %s94 = scalar_select %p91, %s92, %s93
      %p97 = pneg %p91
      %p98 = scmp.eq.s32.totalorder %s18, 1
      %p99 = por %p97, %p98
      %p100 = scmp.ne.s32.totalorder %s92, %s95
      %p101 = scmp.eq.s32.totalorder %s18, 0
      %p102 = por %p100, %p101
      %p103 = scmp.ne.s32.totalorder %s92, %s95
      %p104 = scmp.eq.s32.totalorder %s23, 1
      %p105 = por %p103, %p104
      %p106 = scmp.ne.s32.totalorder %s95, %s96
      %p107 = scmp.eq.s32.totalorder %s23, 0
      %p108 = por %p106, %p107
      %p109 = scmp.ne.s32.totalorder %s95, %s96
      %p110 = scmp.eq.s32.totalorder %s24, 1
      %p111 = por %p109, %p110
      %p113 = scmp.ne.s32.totalorder %s96, %s112
      %p114 = scmp.eq.s32.totalorder %s24, 0
      %p115 = por %p113, %p114
      %s116 = ssub.s32 %s26, %s33
      %p117 = scmp.eq.s32.totalorder %s116, 0
      %s119 = sadd.s32 %s118, 1
      %s120 = scalar_select %p117, %s118, %s119
      %p123 = pneg %p117
      %p124 = scmp.eq.s32.totalorder %s18, 1
      %p125 = por %p123, %p124
      %p126 = scmp.ne.s32.totalorder %s118, %s121
      %p127 = scmp.eq.s32.totalorder %s18, 0
      %p128 = por %p126, %p127
      %p129 = scmp.ne.s32.totalorder %s118, %s121
      %p130 = scmp.eq.s32.totalorder %s23, 1
      %p131 = por %p129, %p130
      %p132 = scmp.ne.s32.totalorder %s121, %s122
      %p133 = scmp.eq.s32.totalorder %s23, 0
      %p134 = por %p132, %p133
      %p135 = scmp.ne.s32.totalorder %s121, %s122
      %p136 = scmp.eq.s32.totalorder %s24, 1
      %p137 = por %p135, %p136
      %p139 = scmp.ne.s32.totalorder %s122, %s138
      %p140 = scmp.eq.s32.totalorder %s24, 0
      %p141 = por %p139, %p140
      %s143 = sadd.s32 %s142, 1
      %p146 = scmp.eq.s32.totalorder %s18, 1
      %p147 = scmp.ne.s32.totalorder %s142, %s144
      %p148 = scmp.eq.s32.totalorder %s18, 0
      %p149 = por %p147, %p148
      %p150 = scmp.ne.s32.totalorder %s142, %s144
      %p151 = scmp.eq.s32.totalorder %s23, 1
      %p152 = por %p150, %p151
      %p153 = scmp.ne.s32.totalorder %s144, %s145
      %p154 = scmp.eq.s32.totalorder %s23, 0
      %p155 = por %p153, %p154
      %p156 = scmp.ne.s32.totalorder %s144, %s145
      %p157 = scmp.eq.s32.totalorder %s24, 1
      %p158 = por %p156, %p157
      %p160 = scmp.ne.s32.totalorder %s145, %s159
      %p161 = scmp.eq.s32.totalorder %s24, 0
      %p162 = por %p160, %p161
      %s163 = ssub.s32 %s25, %s37
      %p164 = scmp.eq.s32.totalorder %s163, 0
      %s166 = sadd.s32 %s165, 1
      %s167 = scalar_select %p164, %s165, %s166
      %p170 = pneg %p164
      %p171 = scmp.eq.s32.totalorder %s18, 1
      %p172 = por %p170, %p171
      %p173 = scmp.ne.s32.totalorder %s165, %s168
      %p174 = scmp.eq.s32.totalorder %s18, 0
      %p175 = por %p173, %p174
      %p176 = scmp.ne.s32.totalorder %s165, %s168
      %p177 = scmp.eq.s32.totalorder %s23, 1
      %p178 = por %p176, %p177
      %p179 = scmp.ne.s32.totalorder %s168, %s169
      %p180 = scmp.eq.s32.totalorder %s23, 0
      %p181 = por %p179, %p180
      %p182 = scmp.ne.s32.totalorder %s168, %s169
      %p183 = scmp.eq.s32.totalorder %s24, 1
      %p184 = por %p182, %p183
      %p186 = scmp.ne.s32.totalorder %s169, %s185
      %p187 = scmp.eq.s32.totalorder %s24, 0
      %p188 = por %p186, %p187
      %p189 = scmp.le.s32.totalorder 1, %s18
      %p190 = scmp.lt.s32.totalorder %s18, 3
      %p191 = pnand %p189, %p190
      %p192 = pneg %p191
      // Predicated region
      $region9: #{tpu_custom_call.1} parent=5 // pred_check
        _
      $region10: #{tpu_custom_call.1} parent=5 // pred_check_branch
        %194 = sbr.rel (%p191) target = $region12
      $region11: #{tpu_custom_call.1} parent=5 // pred_region
        %s195 = ssub.s32 %s18, 1
        // Predicated region
        $region13: #{tpu_custom_call.1} parent=11 // pred_check
          %p196 = pneg %p82
        $region14: #{tpu_custom_call.1} parent=11 // pred_check_branch
          %198 = sbr.rel (%p196) target = $region16
        $region15: #{tpu_custom_call.1} parent=11 // pred_region
          %200 = vsyncadd [#allocation7], 0
          %s201 = smul.addr %s28, 8
          %s202 = scalar_lea.hbm %s1, %s201
          %s203 = sshll.u32 %s202, 4
          %s204 = int_to_ptr.hbm [resolvable:$true] %s203
          %s205 = sshll.u32 [#allocation6], 4
          %s206 = int_to_ptr.vmem [resolvable:$true] %s205
          %211 = dma.hbm_to_vmem [thread:$0]  %s204, 2048, %s206, [#allocation7], 128, 128, 8
        $region16: #{tpu_custom_call.1} parent=11 // pred_fallthru
          _
        // Predicated region
        $region17: #{tpu_custom_call.1} parent=11 // pred_check
          %p212 = pneg %p108
        $region18: #{tpu_custom_call.1} parent=11 // pred_check_branch
          %214 = sbr.rel (%p212) target = $region20
        $region19: #{tpu_custom_call.1} parent=11 // pred_region
          %p215 = scmp.lt.s32.totalorder %s28, 0
          %s216 = scalar_select %p215, %s28, 0
          %s217 = scalar_lea.vmem %s2, %s216
        $region20: #{tpu_custom_call.1} parent=11 // pred_fallthru
          _
        // Predicated region
        $region21: #{tpu_custom_call.1} parent=11 // pred_check
          %p218 = pneg %p134
        $region22: #{tpu_custom_call.1} parent=11 // pred_check_branch
          %220 = sbr.rel (%p218) target = $region24
        $region23: #{tpu_custom_call.1} parent=11 // pred_region
          %s221 = smul.u32 16, %s28
          %223 = vsyncadd [#allocation7], 0
          %s224 = smul.addr %s221, 8
          %s225 = scalar_lea.hbm %s3, %s224
          %s226 = sshll.u32 %s225, 4
          %s227 = int_to_ptr.hbm [resolvable:$true] %s226
          %s228 = sshll.u32 [#allocation8], 4
          %s229 = int_to_ptr.vmem [resolvable:$true] %s228
          %234 = dma.hbm_to_vmem [thread:$0]  %s227, 2048, %s229, [#allocation7], 128, 128, 8
        $region24: #{tpu_custom_call.1} parent=11 // pred_fallthru
          _
        // Predicated region
        $region25: #{tpu_custom_call.1} parent=11 // pred_check
          %p235 = pneg %p155
        $region26: #{tpu_custom_call.1} parent=11 // pred_check_branch
          %237 = sbr.rel (%p235) target = $region28
        $region27: #{tpu_custom_call.1} parent=11 // pred_region
          _
        $region28: #{tpu_custom_call.1} parent=11 // pred_fallthru
          _
      $region12: #{tpu_custom_call.1} parent=5 // pred_fallthru
        _
      %p238 = scmp.lt.s32.totalorder %s18, 2
      // Predicated region
      $region29: #{tpu_custom_call.1} parent=5 // pred_check
        %p239 = pneg %p238
      $region30: #{tpu_custom_call.1} parent=5 // pred_check_branch
        %241 = sbr.rel (%p239) target = $region32
      $region31: #{tpu_custom_call.1} parent=5 // pred_region
        // Predicated region
        $region33: #{tpu_custom_call.1} parent=31 // pred_check
          %p242 = pneg %p50
        $region34: #{tpu_custom_call.1} parent=31 // pred_check_branch
          %244 = sbr.rel (%p242) target = $region36
        $region35: #{tpu_custom_call.1} parent=31 // pred_region
          %s245 = sand.u32 %s40, 1
          %s246 = scalar_lea.sflag [#allocation4], %s245
          %s247 = sand.u32 %s40, 1
          %s248 = smul.addr %s247, 8
          %s249 = scalar_lea.vmem [#allocation3], %s248
          %251 = vsyncadd %s246, 0
          %s252 = smul.addr %s25, 8
          %s253 = scalar_lea.hbm %s0, %s252
          %s255 = sshll.u32 %s253, 4
          %s256 = int_to_ptr.hbm [resolvable:$true] %s255
          %s257 = sshll.u32 %s249, 4
          %s258 = int_to_ptr.vmem [resolvable:$true] %s257
          %260 = dma.hbm_to_vmem [thread:$0]  %s256, 128, %s258, %s246
        $region36: #{tpu_custom_call.1} parent=31 // pred_fallthru
          _
      $region32: #{tpu_custom_call.1} parent=5 // pred_fallthru
        _
      %p261 = scmp.le.s32.totalorder 1, %s18
      %p262 = scmp.lt.s32.totalorder %s18, 3
      %p263 = pnand %p261, %p262
      %p264 = pneg %p263
      // Predicated region
      $region37: #{tpu_custom_call.1} parent=5 // pred_check
        _
      $region38: #{tpu_custom_call.1} parent=5 // pred_check_branch
        %266 = sbr.rel (%p263) target = $region40
      $region39: #{tpu_custom_call.1} parent=5 // pred_region
        %s267 = ssub.s32 %s18, 1
        %s268 = sand.u32 %s43, 1
        %s269 = scalar_lea.sflag [#allocation4], %s268
        %s270 = sand.u32 %s43, 1
        %s271 = smul.addr %s270, 8
        %s272 = scalar_lea.vmem [#allocation3], %s271
        // Predicated region
        $region41: #{tpu_custom_call.1} parent=39 // pred_check
          %p273 = pneg %p56
        $region42: #{tpu_custom_call.1} parent=39 // pred_check_branch
          %275 = sbr.rel (%p273) target = $region44
        $region43: #{tpu_custom_call.1} parent=39 // pred_region
          %277 = dma.done %s269, 128
        $region44: #{tpu_custom_call.1} parent=39 // pred_fallthru
          _
        // Predicated region
        $region45: #{tpu_custom_call.1} parent=39 // pred_check
          %p278 = pneg %p82
        $region46: #{tpu_custom_call.1} parent=39 // pred_check_branch
          %280 = sbr.rel (%p278) target = $region48
        $region47: #{tpu_custom_call.1} parent=39 // pred_region
          %282 = dma.done [#allocation7], 2048
        $region48: #{tpu_custom_call.1} parent=39 // pred_fallthru
          _
        // Predicated region
        $region49: #{tpu_custom_call.1} parent=39 // pred_check
          %p283 = pneg %p134
        $region50: #{tpu_custom_call.1} parent=39 // pred_check_branch
          %285 = sbr.rel (%p283) target = $region52
        $region51: #{tpu_custom_call.1} parent=39 // pred_region
          %287 = dma.done [#allocation7], 2048
        $region52: #{tpu_custom_call.1} parent=39 // pred_fallthru
          _
        %s288 = sand.u32 %s43, 1
        %s289 = scalar_lea.sflag [#allocation4], %s288
        %s290 = sand.u32 %s43, 1
        %s291 = smul.addr %s290, 8
        %s292 = scalar_lea.vmem [#allocation3], %s291
        %p293 = pneg %p56
        %p294 = pneg %p53
        %p295 = pneg %p82
        %p296 = pneg %p79
        %p297 = scmp.lt.s32.totalorder %s28, 0
        %s298 = scalar_select %p297, %s28, 0
        %s299 = scalar_lea.vmem %s2, %s298
        %p300 = pneg %p108
        %p301 = pneg %p105
        %p302 = pneg %p134
        %p303 = pneg %p131
        %p304 = pneg %p155
        %p305 = pneg %p152
        %p306 = pneg %p181
        %p307 = pneg %p178
        %s308 = sand.u32 %s168, 1
        %s309 = scalar_lea.sflag [#allocation5], %s308
        %s310 = sand.u32 %s168, 1
        %s311 = smul.addr %s310, 8
        %s312 = scalar_lea.vmem [#allocation9], %s311
        %p313 = scmp.lt.s32.totalorder %s28, 0
        %s314 = scalar_select %p313, %s28, 0
        %s315 = scalar_lea.vmem %s2, %s314
        %s316 = smul.u32 16, %s28
        %v317 = vld [vmem:[%s272] sm:$0xff]
        %v318 = vld [vmem:[#allocation6] sm:$0xff]
        %v319 = vld [vmem:[#allocation6 + $0x8] sm:$0xff]
        %v320 = vld [vmem:[#allocation6 + $0x10] sm:$0xff]
        %v321 = vld [vmem:[#allocation6 + $0x18] sm:$0xff]
        %v322 = vld [vmem:[#allocation6 + $0x20] sm:$0xff]
        %v323 = vld [vmem:[#allocation6 + $0x28] sm:$0xff]
        %v324 = vld [vmem:[#allocation6 + $0x30] sm:$0xff]
        %v325 = vld [vmem:[#allocation6 + $0x38] sm:$0xff]
        %v326 = vld [vmem:[#allocation6 + $0x40] sm:$0xff]
        %v327 = vld [vmem:[#allocation6 + $0x48] sm:$0xff]
        %v328 = vld [vmem:[#allocation6 + $0x50] sm:$0xff]
        %v329 = vld [vmem:[#allocation6 + $0x58] sm:$0xff]
        %v330 = vld [vmem:[#allocation6 + $0x60] sm:$0xff]
        %v331 = vld [vmem:[#allocation6 + $0x68] sm:$0xff]
        %v332 = vld [vmem:[#allocation6 + $0x70] sm:$0xff]
        %v333 = vld [vmem:[#allocation6 + $0x78] sm:$0xff]
        %v334 = vld [vmem:[%s315] sm:$0x1]
        %v336 = vperm.slane %v334, 0
        %338 = vmatpush.msra.mxu0 %v333
        %339 = vmatpush.msra.mxu0 %v332
        %340 = vmatpush.msra.mxu0 %v331
        %341 = vmatpush.msra.mxu0 %v330
        %342 = vmatpush.msra.mxu0 %v329
        %343 = vmatpush.msra.mxu0 %v328
        %344 = vmatpush.msra.mxu0 %v327
        %345 = vmatpush.msra.mxu0 %v326
        %346 = vmatpush.msra.mxu0 %v325
        %347 = vmatpush.msra.mxu0 %v324
        %348 = vmatpush.msra.mxu0 %v323
        %349 = vmatpush.msra.mxu0 %v322
        %350 = vmatpush.msra.mxu0 %v321
        %351 = vmatpush.msra.mxu0 %v320
        %352 = vmatpush.msra.mxu0 %v319
        %353 = vmatpush.msra.mxu0 %v318
        %354 = vmatmul.f32.gmra.mxu0 %v317
        %v355 = vpop.f32.mrf.mxu0
        %v356 = vadd.f32 %v336, %v355
        %357 = vdwg.mxu0
        %v358 = vmax.f32 %v356, 0.0
        %v359 = vld [vmem:[#allocation8] sm:$0xff]
        %v360 = vld [vmem:[#allocation8 + $0x8] sm:$0xff]
        %v361 = vld [vmem:[#allocation8 + $0x10] sm:$0xff]
        %v362 = vld [vmem:[#allocation8 + $0x18] sm:$0xff]
        %v363 = vld [vmem:[#allocation8 + $0x20] sm:$0xff]
        %v364 = vld [vmem:[#allocation8 + $0x28] sm:$0xff]
        %v365 = vld [vmem:[#allocation8 + $0x30] sm:$0xff]
        %v366 = vld [vmem:[#allocation8 + $0x38] sm:$0xff]
        %v367 = vld [vmem:[#allocation8 + $0x40] sm:$0xff]
        %v368 = vld [vmem:[#allocation8 + $0x48] sm:$0xff]
        %v369 = vld [vmem:[#allocation8 + $0x50] sm:$0xff]
        %v370 = vld [vmem:[#allocation8 + $0x58] sm:$0xff]
        %v371 = vld [vmem:[#allocation8 + $0x60] sm:$0xff]
        %v372 = vld [vmem:[#allocation8 + $0x68] sm:$0xff]
        %v373 = vld [vmem:[#allocation8 + $0x70] sm:$0xff]
        %v374 = vld [vmem:[#allocation8 + $0x78] sm:$0xff]
        %375 = vmatpush.msra.mxu0 %v374
        %376 = vmatpush.msra.mxu0 %v373
        %377 = vmatpush.msra.mxu0 %v372
        %378 = vmatpush.msra.mxu0 %v371
        %379 = vmatpush.msra.mxu0 %v370
        %380 = vmatpush.msra.mxu0 %v369
        %381 = vmatpush.msra.mxu0 %v368
        %382 = vmatpush.msra.mxu0 %v367
        %383 = vmatpush.msra.mxu0 %v366
        %384 = vmatpush.msra.mxu0 %v365
        %385 = vmatpush.msra.mxu0 %v364
        %386 = vmatpush.msra.mxu0 %v363
        %387 = vmatpush.msra.mxu0 %v362
        %388 = vmatpush.msra.mxu0 %v361
        %389 = vmatpush.msra.mxu0 %v360
        %390 = vmatpush.msra.mxu0 %v359
        %391 = vmatmul.f32.gmra.mxu0 %v358
        %v392 = vpop.f32.mrf.mxu0
        %v393 = vadd.f32 0.0, %v392
        %394 = vdwg.mxu0
        %p395 = scmp.eq.s32.totalorder %s28, 0
        // Predicated region
        $region53: #{tpu_custom_call.1} parent=39 // pred_check
          %p396 = pneg %p395
        $region54: #{tpu_custom_call.1} parent=39 // pred_check_branch
          %398 = sbr.rel (%p396) target = $region56
        $region55: #{tpu_custom_call.1} parent=39 // pred_region
          %399 = vst [vmem:[#allocation2] sm:$0xff] %v393
        $region56: #{tpu_custom_call.1} parent=39 // pred_fallthru
          _
        %p400 = scmp.gt.s32.totalorder %s28, 0
        // Predicated region
        $region57: #{tpu_custom_call.1} parent=39 // pred_check
          %p401 = pneg %p400
        $region58: #{tpu_custom_call.1} parent=39 // pred_check_branch
          %403 = sbr.rel (%p401) target = $region60
        $region59: #{tpu_custom_call.1} parent=39 // pred_region
          %v404 = vld [vmem:[#allocation2] sm:$0xff]
          %v405 = vadd.f32 %v404, %v393
          %406 = vst [vmem:[#allocation2] sm:$0xff] %v405
        $region60: #{tpu_custom_call.1} parent=39 // pred_fallthru
          _
        // Predicated region
        $region61: #{tpu_custom_call.1} parent=39 // pred_check
          %p407 = pneg %p395
        $region62: #{tpu_custom_call.1} parent=39 // pred_check_branch
          %409 = sbr.rel (%p407) target = $region64
        $region63: #{tpu_custom_call.1} parent=39 // pred_region
          %v410 = vld [vmem:[#allocation2] sm:$0xff]
          %v411 = vld [vmem:[%s4] sm:$0x1]
          %v413 = vperm.slane %v411, 0
          %v415 = vadd.f32 %v410, %v413
          %416 = vst [vmem:[%s312] sm:$0xff] %v415
        $region64: #{tpu_custom_call.1} parent=39 // pred_fallthru
          _
        %s417 = sand.u32 %s168, 1
        %s418 = scalar_lea.sflag [#allocation5], %s417
        %s419 = sand.u32 %s168, 1
        %s420 = smul.addr %s419, 8
        %s421 = scalar_lea.vmem [#allocation9], %s420
        // Predicated region
        $region65: #{tpu_custom_call.1} parent=39 // pred_check
          %p422 = pneg %p178
        $region66: #{tpu_custom_call.1} parent=39 // pred_check_branch
          %424 = sbr.rel (%p422) target = $region68
        $region67: #{tpu_custom_call.1} parent=39 // pred_region
          %426 = vsyncadd %s418, 0
          %s427 = smul.addr %s27, 8
          %s428 = scalar_lea.hbm %s5, %s427
          %s430 = sshll.u32 %s421, 4
          %s431 = int_to_ptr.vmem [resolvable:$true] %s430
          %s432 = sshll.u32 %s428, 4
          %s433 = int_to_ptr.hbm [resolvable:$true] %s432
          %435 = dma.vmem_to_hbm [thread:$0]  %s431, 128, %s433, %s418
        $region68: #{tpu_custom_call.1} parent=39 // pred_fallthru
          _
      $region40: #{tpu_custom_call.1} parent=5 // pred_fallthru
        _
      %p436 = scmp.le.s32.totalorder 2, %s18
      // Predicated region
      $region69: #{tpu_custom_call.1} parent=5 // pred_check
        %p437 = pneg %p436
      $region70: #{tpu_custom_call.1} parent=5 // pred_check_branch
        %439 = sbr.rel (%p437) target = $region72
      $region71: #{tpu_custom_call.1} parent=5 // pred_region
        %s440 = ssub.s32 %s18, 2
        // Predicated region
        $region73: #{tpu_custom_call.1} parent=71 // pred_check
          %p441 = pneg %p184
        $region74: #{tpu_custom_call.1} parent=71 // pred_check_branch
          %443 = sbr.rel (%p441) target = $region76
        $region75: #{tpu_custom_call.1} parent=71 // pred_region
          %s444 = sand.u32 %s169, 1
          %s445 = scalar_lea.sflag [#allocation5], %s444
          %s446 = sand.u32 %s169, 1
          %s447 = smul.addr %s446, 8
          %s448 = scalar_lea.vmem [#allocation9], %s447
          %450 = dma.done %s445, 128
        $region76: #{tpu_custom_call.1} parent=71 // pred_fallthru
          _
      $region72: #{tpu_custom_call.1} parent=5 // pred_fallthru
        _
    $region6: #{tpu_custom_call.1} parent=1 // loop_footer
      %s22 = sadd.s32 1, %s18
    $region7: #{tpu_custom_call.1} parent=1 // loop_footer_branch
      %17 = sbr.rel target = $region3
    $region8: #{tpu_custom_call.1} parent=1 // loop_exit
      _
    %451 = vsyncpa [#allocation4], 1
    %s452 = scalar_lea.sflag [#allocation4], 1
    %453 = vsyncpa %s452, 1
    %454 = vsyncpa [#allocation7], 1
    %455 = vsyncpa [#allocation5], 1
    %s456 = scalar_lea.sflag [#allocation5], 1
    %457 = vsyncpa %s456, 1

</llo_original>
